<compile_context>
chip_gen: v7x
topology: tpu7x:2x2x1
jax: 0.10.0
libtpu: 0.0.40
codegen_flags: <defaults>
</compile_context>

<pallas_src>
import math

import jax
import jax.numpy as jnp
from jax.experimental import pallas as pl
from jax.experimental.pallas import tpu as pltpu

# ----------------------------- problem sizes ------------------------------
B, S = 1, 2          # obs comes in 4-D -> unsqueeze(0) -> batch=1, seq=2
N_FR = B * S         # frames flattened through the CNN
C, H, W = 4, 16, 16  # per-frame observation
OC, KH, KW, STRIDE = 8, 3, 3, 2
OH = (H - KH) // STRIDE + 1
OW = (W - KW) // STRIDE + 1
OHW = OH * OW
CKK = C * KH * KW
FEAT = OC * OHW      # cnn_net(dummy_img).shape[1]
ACT_DIM = 3
A2 = 2 * ACT_DIM

# --------------------------- in-kernel helpers -----------------------------
_LANCZOS_G = 7.0
_LANCZOS_COEF = (
    0.99999999999980993,
    676.5203681218851,
    -1259.1392167224028,
    771.32342877765313,
    -176.61502916214059,
    12.507343278686905,
    -0.13857109526572012,
    9.9843695780195716e-6,
    1.5056327351493116e-7,
)
_HALF_LOG_2PI = 0.5 * math.log(2.0 * math.pi)


def _recip(x):
    # EUP approximate reciprocal + one Newton step: stays off the VALU divide
    # chain, accuracy is ~f32-exact (logp is checked against lax.lgamma).
    r = pl.reciprocal(x, approx=True)
    return r * (2.0 - x * r)


def _lgamma(z):
    # Lanczos approximation, valid for z >= 1 (alpha, beta > 1 here).
    x = jnp.full_like(z, _LANCZOS_COEF[0])
    for i in range(1, len(_LANCZOS_COEF)):
        x = x + _LANCZOS_COEF[i] * _recip(z + (i - 1.0))
    t = z + (_LANCZOS_G - 0.5)
    return _HALF_LOG_2PI + (z - 0.5) * jnp.log(t) - t + jnp.log(x)


def _softplus(x):
    # numerically-stable softplus (matches nn.Softplus default)
    return jnp.maximum(x, 0.0) + jnp.log(1.0 + jnp.exp(-jnp.abs(x)))


# ------------------------------ fused kernel -------------------------------
def fused_actor_kernel(slab_ref, p_ref, act_ref, out_ref):
    """conv(one im2col matmul)+ReLU -> alpha/beta heads -> Beta log_prob, one pass.

    slab_ref : (2A+2, OC, N*OHW) packed params:
               [0:2A]            -> head weights, frame-tiled: w[a, oc, f*OHW+p]
               [2A, :, 0:CKK]    -> conv weight (PyTorch flatten order)
               [2A, :, CKK]      -> conv bias
               [2A, 0:2A, CKK+1] -> head bias [ba; bb]
               [2A+1, 0:N, :]    -> frame selector sfrT[f, f'*OHW+p] = delta(f,f')
    p_ref    : (CKK, N*OHW)   transposed im2col patches (lane = f*OHW + p)
    act_ref  : (A, N)         raw actions, transposed (frames on lanes)
    out_ref  : (2A + 1, N)    packed [alpha(3) ; beta(3) ; logp(1)], frames on lanes
    """
    a2 = out_ref.shape[0] - 1          # 2 * act_dim
    act_dim = a2 // 2
    nf = act_ref.shape[1]              # number of frames
    ckk = p_ref.shape[0]               # C*KH*KW

    # ---- unpack the packed parameter slab (static VMEM-ref slices: cheap) ----
    wexp = slab_ref[0:a2, :, :]                      # (2A, OC, N*OHW)
    wc = slab_ref[a2, :, 0:ckk]                      # (OC, CKK)
    bc = slab_ref[a2, :, ckk:ckk + 1]                # (OC, 1)
    bab = slab_ref[a2, 0:a2, ckk + 1:ckk + 2]        # (2A, 1)
    sfrT = slab_ref[a2 + 1, 0:nf, :]                 # (N, N*OHW)

    # ---- conv + bias + ReLU: ONE lane-dense f32 MXU dot (keep f32, keep single) ----
    z = jnp.dot(wc, p_ref[...], preferred_element_type=jnp.float32)   # (OC, N*OHW)
    z = jnp.maximum(z + bc, 0.0)

    # ---- alpha/beta heads: VPU broadcast-mul + sublane reduce + ONE tiny NT dot ---
    # hzT[a, f] = sum_{oc, p} wexp[a, oc, f*OHW+p] * z[oc, f*OHW+p]
    prod = wexp * z[None, :, :]                      # (2A, OC, N*OHW)  VPU
    part = jnp.sum(prod, axis=1)                     # (2A, N*OHW)      sublane reduce
    hzT = jax.lax.dot_general(                       # frame segment sum over lanes
        part, sfrT, (((1,), (1,)), ((), ())),
        preferred_element_type=jnp.float32)          # (2A, N)
    hzT = hzT + bab

    # ---- Softplus (+1) ONCE on the packed (2A, N) tile ----
    ab = _softplus(hzT) + 1.0                        # rows 0:A alpha, rows A:2A beta

    # ---- Beta(alpha, beta).log_prob(u), summed over the action dim ----
    # NOTE: u is bounded away from {0,1} by the test inputs; the PyTorch
    # reference does not clamp either, so we keep the exact same form.
    u = (act_ref[...] + 1.0) * 0.5                   # (A, N) rescale to (0, 1)
    uu = jnp.concatenate([u, 1.0 - u], axis=0)       # (2A, N)
    # ONE batched lgamma on [alpha ; beta ; alpha+beta]
    lg_in = jnp.concatenate([ab, ab[0:act_dim] + ab[act_dim:a2]], axis=0)  # (3A, N)
    lg = _lgamma(lg_in)
    term = (ab - 1.0) * jnp.log(uu) - lg[0:a2]       # (2A, N)
    logp = (jnp.sum(term, axis=0, keepdims=True)
            + jnp.sum(lg[a2:a2 + act_dim], axis=0, keepdims=True))        # (1, N)

    out_ref[0:a2, :] = ab
    out_ref[a2:a2 + 1, :] = logp


_VMEM_SPEC = pl.BlockSpec(memory_space=pltpu.MemorySpace.VMEM)


# --------------------------------- glue ------------------------------------
def init_params(key):
    k = jax.random.split(key, 6)
    scale = 0.1
    return dict(
        conv_w=scale * jax.random.normal(k[0], (OC, C, KH, KW), jnp.float32),
        conv_b=scale * jax.random.normal(k[1], (OC,), jnp.float32),
        wa=scale * jax.random.normal(k[2], (FEAT, ACT_DIM), jnp.float32),
        ba=scale * jax.random.normal(k[3], (ACT_DIM,), jnp.float32),
        wb=scale * jax.random.normal(k[4], (FEAT, ACT_DIM), jnp.float32),
        bb=scale * jax.random.normal(k[5], (ACT_DIM,), jnp.float32),
    )


def pack_params(params):
    """Pack ALL constant parameters once (outside the per-call jit) into a single
    lane-dense f32 slab of shape (2A+2, OC, N*OHW). Long axis is last everywhere."""
    wc = params["conv_w"].reshape(OC, CKK)                              # (8, 36)
    whead = jnp.concatenate([params["wa"], params["wb"]], axis=1)       # (392, 6)
    w3 = whead.reshape(OC, OHW, A2)                                     # [oc, p, a]
    wexp = jnp.transpose(w3, (2, 0, 1))                                 # (2A, OC, OHW)
    wexp = jnp.concatenate([wexp] * N_FR, axis=-1)                      # frame-tiled
    bab = jnp.concatenate([params["ba"], params["bb"]])                 # (2A,)
    sfrT = jnp.repeat(jnp.eye(N_FR, dtype=jnp.float32), OHW, axis=1)    # (N, N*OHW)

    slab = jnp.zeros((A2 + 2, OC, N_FR * OHW), jnp.float32)
    slab = slab.at[0:A2].set(wexp)
    slab = slab.at[A2, :, 0:CKK].set(wc)
    slab = slab.at[A2, :, CKK].set(params["conv_b"])
    slab = slab.at[A2, 0:A2, CKK + 1].set(bab)
    slab = slab.at[A2 + 1, 0:N_FR, :].set(sfrT)
    return slab


@jax.jit
def mlp_beta_actor_forward(obs, act, slab):
    """Returns (alpha, beta, logp_a): alpha/beta parametrize the Beta 'pi'."""
    # --- shape bookkeeping identical to the PyTorch _distribution() ----------
    if obs.ndim == 4:
        obs = obs[None]                               # unsqueeze(0) -> (B, S, C, H, W)
    # TODO(synk): 6-D obs squeeze/reshape branches of _distribution are not exercised here.
    b, s = obs.shape[0], obs.shape[1]
    n = b * s
    x = obs.reshape((n,) + obs.shape[2:])             # (N, C, H, W)

    # --- im2col as a single fused XLA op (patches emitted directly as (CKK, N, OH, OW),
    #     channel ordering = (c, kh, kw) matching the PyTorch weight flatten) ---------
    patches = jax.lax.conv_general_dilated_patches(
        x, (KH, KW), (STRIDE, STRIDE), "VALID",
        dimension_numbers=("NCHW", "OIHW", "CNHW"))   # (CKK, N, OH, OW)
    patches = patches.reshape(CKK, n * OHW)           # lane index = f*OHW + (oh*OW+ow)

    act_t = act.reshape(n, ACT_DIM).T                 # (A, N); rescale done in-kernel

    out = pl.pallas_call(
        fused_actor_kernel,
        out_shape=jax.ShapeDtypeStruct((A2 + 1, n), jnp.float32),
        in_specs=[_VMEM_SPEC] * 3,
        out_specs=_VMEM_SPEC,
    )(slab, patches, act_t)

    alpha = out[0:ACT_DIM, :].T.reshape(b, s, ACT_DIM)
    beta = out[ACT_DIM:A2, :].T.reshape(b, s, ACT_DIM)
    logp = out[A2, :].reshape(b, s)
    return alpha, beta, logp


# ------------------------------ pure-JAX ref --------------------------------
def ref_forward(obs, act, params):
    if obs.ndim == 4:
        obs = obs[None]
    b, s = obs.shape[0], obs.shape[1]
    x = obs.reshape((b * s,) + obs.shape[2:])
    y = jax.lax.conv_general_dilated(
        x, params["conv_w"], (STRIDE, STRIDE), "VALID",
        dimension_numbers=("NCHW", "OIHW", "NCHW"))
    y = jax.nn.relu(y + params["conv_b"][None, :, None, None])
    feat = y.reshape(b * s, -1)
    alpha = jax.nn.softplus(feat @ params["wa"] + params["ba"]) + 1.0
    beta = jax.nn.softplus(feat @ params["wb"] + params["bb"]) + 1.0
    u = ((act + 1.0) / 2.0).reshape(b * s, ACT_DIM)
    lg = jax.lax.lgamma
    logp = ((alpha - 1.0) * jnp.log(u) + (beta - 1.0) * jnp.log(1.0 - u)
            + lg(alpha + beta) - lg(alpha) - lg(beta)).sum(-1)
    return (alpha.reshape(b, s, ACT_DIM),
            beta.reshape(b, s, ACT_DIM),
            logp.reshape(b, s))


if __name__ == "__main__":
    key = jax.random.PRNGKey(0)
    pkey, okey, akey = jax.random.split(key, 3)

    params = init_params(pkey)
    slab = pack_params(params)          # packed ONCE, off the per-call critical path

    obs = jax.random.uniform(okey, (S, C, H, W), jnp.float32)          # 4-D path
    act = jax.random.uniform(akey, (B, S, ACT_DIM), jnp.float32,
                             minval=-0.9, maxval=0.9)

    alpha, beta, logp = mlp_beta_actor_forward(obs, act, slab)
    jax.block_until_ready((alpha, beta, logp))

    ra, rb, rl = ref_forward(obs, act, params)
    assert jnp.allclose(alpha, ra, atol=1e-3, rtol=1e-3), "alpha mismatch"
    assert jnp.allclose(beta, rb, atol=1e-3, rtol=1e-3), "beta mismatch"
    assert jnp.allclose(logp, rl, atol=1e-2, rtol=1e-3), "logp mismatch"

    print("KERNEL_OK")
</pallas_src>

<mosaic_0001>
module attributes {stable_mosaic.version = 11 : i64} {
  func.func @fused_actor_kernel(%arg0: memref<8x8x98xf32, #tpu.memory_space<vmem>>, %arg1: memref<36x98xf32, #tpu.memory_space<vmem>>, %arg2: memref<3x2xf32, #tpu.memory_space<vmem>>, %arg3: memref<7x2xf32, #tpu.memory_space<vmem>>) attributes {dimension_semantics = [], scalar_prefetch = 0 : i64, scratch_operands = 0 : i64, tpu.core_type = #tpu.core_type<tc>} {
    %c0 = arith.constant 0 : index
    %c0_0 = arith.constant 0 : index
    %c0_1 = arith.constant 0 : index
    %0 = vector.load %arg0[%c0, %c0_0, %c0_1] : memref<8x8x98xf32, #tpu.memory_space<vmem>>, vector<6x8x98xf32>
    %c6 = arith.constant 6 : index
    %c0_2 = arith.constant 0 : index
    %c0_3 = arith.constant 0 : index
    %1 = vector.load %arg0[%c6, %c0_2, %c0_3] : memref<8x8x98xf32, #tpu.memory_space<vmem>>, vector<1x8x36xf32>
    %2 = vector.shape_cast %1 : vector<1x8x36xf32> to vector<8x36xf32>
    %c6_4 = arith.constant 6 : index
    %c0_5 = arith.constant 0 : index
    %c36 = arith.constant 36 : index
    %3 = vector.load %arg0[%c6_4, %c0_5, %c36] : memref<8x8x98xf32, #tpu.memory_space<vmem>>, vector<1x8x1xf32>
    %4 = vector.shape_cast %3 : vector<1x8x1xf32> to vector<8x1xf32>
    %c6_6 = arith.constant 6 : index
    %c0_7 = arith.constant 0 : index
    %c37 = arith.constant 37 : index
    %5 = vector.load %arg0[%c6_6, %c0_7, %c37] : memref<8x8x98xf32, #tpu.memory_space<vmem>>, vector<1x6x1xf32>
    %6 = vector.shape_cast %5 : vector<1x6x1xf32> to vector<6x1xf32>
    %c7 = arith.constant 7 : index
    %c0_8 = arith.constant 0 : index
    %c0_9 = arith.constant 0 : index
    %7 = vector.load %arg0[%c7, %c0_8, %c0_9] : memref<8x8x98xf32, #tpu.memory_space<vmem>>, vector<1x2x98xf32>
    %8 = vector.shape_cast %7 : vector<1x2x98xf32> to vector<2x98xf32>
    %c0_10 = arith.constant 0 : index
    %c0_11 = arith.constant 0 : index
    %9 = vector.load %arg1[%c0_10, %c0_11] : memref<36x98xf32, #tpu.memory_space<vmem>>, vector<36x98xf32>
    %cst = arith.constant dense<0.000000e+00> : vector<8x98xf32>
    %10 = tpu.matmul %2, %9, %cst {dimension_numbers = #tpu.dot_dimension_numbers<[1], [0], [0], [1], [0, 0, 1, 1], [], []>} : vector<8x36xf32>, vector<36x98xf32>, vector<8x98xf32> -> vector<8x98xf32>
    %11 = vector.broadcast %4 : vector<8x1xf32> to vector<8x98xf32>
    %12 = arith.addf %10, %11 : vector<8x98xf32>
    %cst_12 = arith.constant 0.000000e+00 : f32
    %13 = vector.broadcast %cst_12 : f32 to vector<8x98xf32>
    %14 = arith.maximumf %12, %13 : vector<8x98xf32>
    %15 = vector.shape_cast %14 : vector<8x98xf32> to vector<1x8x98xf32>
    %16 = vector.broadcast %15 : vector<1x8x98xf32> to vector<6x8x98xf32>
    %17 = arith.mulf %0, %16 : vector<6x8x98xf32>
    %cst_13 = arith.constant dense<0.000000e+00> : vector<6x98xf32>
    %18 = vector.multi_reduction <add>, %17, %cst_13 [1] : vector<6x8x98xf32> to vector<6x98xf32>
    %cst_14 = arith.constant dense<0.000000e+00> : vector<6x2xf32>
    %19 = tpu.matmul %18, %8, %cst_14 {dimension_numbers = #tpu.dot_dimension_numbers<[1], [1], [0], [0], [0, 0, 1, 0], [], []>} : vector<6x98xf32>, vector<2x98xf32>, vector<6x2xf32> -> vector<6x2xf32>
    %20 = vector.broadcast %6 : vector<6x1xf32> to vector<6x2xf32>
    %21 = arith.addf %19, %20 : vector<6x2xf32>
    %cst_15 = arith.constant 0.000000e+00 : f32
    %22 = vector.broadcast %cst_15 : f32 to vector<6x2xf32>
    %23 = arith.maximumf %21, %22 : vector<6x2xf32>
    %24 = math.absf %21 : vector<6x2xf32>
    %cst_16 = arith.constant 0.000000e+00 : f32
    %25 = vector.broadcast %cst_16 : f32 to vector<6x2xf32>
    %26 = arith.subf %25, %24 : vector<6x2xf32>
    %27 = math.exp %26 : vector<6x2xf32>
    %cst_17 = arith.constant 1.000000e+00 : f32
    %28 = vector.broadcast %cst_17 : f32 to vector<6x2xf32>
    %29 = arith.addf %28, %27 : vector<6x2xf32>
    %30 = math.log %29 : vector<6x2xf32>
    %31 = arith.addf %23, %30 : vector<6x2xf32>
    %cst_18 = arith.constant 1.000000e+00 : f32
    %32 = vector.broadcast %cst_18 : f32 to vector<6x2xf32>
    %33 = arith.addf %31, %32 : vector<6x2xf32>
    %c0_19 = arith.constant 0 : index
    %c0_20 = arith.constant 0 : index
    %34 = vector.load %arg2[%c0_19, %c0_20] : memref<3x2xf32, #tpu.memory_space<vmem>>, vector<3x2xf32>
    %cst_21 = arith.constant 1.000000e+00 : f32
    %35 = vector.broadcast %cst_21 : f32 to vector<3x2xf32>
    %36 = arith.addf %34, %35 : vector<3x2xf32>
    %cst_22 = arith.constant 5.000000e-01 : f32
    %37 = vector.broadcast %cst_22 : f32 to vector<3x2xf32>
    %38 = arith.mulf %36, %37 : vector<3x2xf32>
    %cst_23 = arith.constant 1.000000e+00 : f32
    %39 = vector.broadcast %cst_23 : f32 to vector<3x2xf32>
    %40 = arith.subf %39, %38 : vector<3x2xf32>
    %41 = tpu.concatenate %38, %40 in 0 : vector<3x2xf32>, vector<3x2xf32> -> vector<6x2xf32>
    %42 = vector.extract_strided_slice %33 {offsets = [0, 0], sizes = [3, 2], strides = [1, 1]} : vector<6x2xf32> to vector<3x2xf32>
    %43 = vector.extract_strided_slice %33 {offsets = [3, 0], sizes = [3, 2], strides = [1, 1]} : vector<6x2xf32> to vector<3x2xf32>
    %44 = arith.addf %42, %43 : vector<3x2xf32>
    %45 = tpu.concatenate %33, %44 in 0 : vector<6x2xf32>, vector<3x2xf32> -> vector<9x2xf32>
    %cst_24 = arith.constant 1.000000e+00 : f32
    %46 = vector.broadcast %cst_24 : f32 to vector<9x2xf32>
    %cst_25 = arith.constant 0.000000e+00 : f32
    %47 = vector.broadcast %cst_25 : f32 to vector<9x2xf32>
    %48 = arith.addf %45, %47 : vector<9x2xf32>
    %49 = tpu.reciprocal %48 {approx = true} : vector<9x2xf32> -> vector<9x2xf32>
    %50 = arith.mulf %48, %49 : vector<9x2xf32>
    %cst_26 = arith.constant 2.000000e+00 : f32
    %51 = vector.broadcast %cst_26 : f32 to vector<9x2xf32>
    %52 = arith.subf %51, %50 : vector<9x2xf32>
    %53 = arith.mulf %49, %52 : vector<9x2xf32>
    %cst_27 = arith.constant 676.520386 : f32
    %54 = vector.broadcast %cst_27 : f32 to vector<9x2xf32>
    %55 = arith.mulf %54, %53 : vector<9x2xf32>
    %56 = arith.addf %46, %55 : vector<9x2xf32>
    %cst_28 = arith.constant 1.000000e+00 : f32
    %57 = vector.broadcast %cst_28 : f32 to vector<9x2xf32>
    %58 = arith.addf %45, %57 : vector<9x2xf32>
    %59 = tpu.reciprocal %58 {approx = true} : vector<9x2xf32> -> vector<9x2xf32>
    %60 = arith.mulf %58, %59 : vector<9x2xf32>
    %cst_29 = arith.constant 2.000000e+00 : f32
    %61 = vector.broadcast %cst_29 : f32 to vector<9x2xf32>
    %62 = arith.subf %61, %60 : vector<9x2xf32>
    %63 = arith.mulf %59, %62 : vector<9x2xf32>
    %cst_30 = arith.constant -1259.13916 : f32
    %64 = vector.broadcast %cst_30 : f32 to vector<9x2xf32>
    %65 = arith.mulf %64, %63 : vector<9x2xf32>
    %66 = arith.addf %56, %65 : vector<9x2xf32>
    %cst_31 = arith.constant 2.000000e+00 : f32
    %67 = vector.broadcast %cst_31 : f32 to vector<9x2xf32>
    %68 = arith.addf %45, %67 : vector<9x2xf32>
    %69 = tpu.reciprocal %68 {approx = true} : vector<9x2xf32> -> vector<9x2xf32>
    %70 = arith.mulf %68, %69 : vector<9x2xf32>
    %cst_32 = arith.constant 2.000000e+00 : f32
    %71 = vector.broadcast %cst_32 : f32 to vector<9x2xf32>
    %72 = arith.subf %71, %70 : vector<9x2xf32>
    %73 = arith.mulf %69, %72 : vector<9x2xf32>
    %cst_33 = arith.constant 771.323425 : f32
    %74 = vector.broadcast %cst_33 : f32 to vector<9x2xf32>
    %75 = arith.mulf %74, %73 : vector<9x2xf32>
    %76 = arith.addf %66, %75 : vector<9x2xf32>
    %cst_34 = arith.constant 3.000000e+00 : f32
    %77 = vector.broadcast %cst_34 : f32 to vector<9x2xf32>
    %78 = arith.addf %45, %77 : vector<9x2xf32>
    %79 = tpu.reciprocal %78 {approx = true} : vector<9x2xf32> -> vector<9x2xf32>
    %80 = arith.mulf %78, %79 : vector<9x2xf32>
    %cst_35 = arith.constant 2.000000e+00 : f32
    %81 = vector.broadcast %cst_35 : f32 to vector<9x2xf32>
    %82 = arith.subf %81, %80 : vector<9x2xf32>
    %83 = arith.mulf %79, %82 : vector<9x2xf32>
    %cst_36 = arith.constant -176.615036 : f32
    %84 = vector.broadcast %cst_36 : f32 to vector<9x2xf32>
    %85 = arith.mulf %84, %83 : vector<9x2xf32>
    %86 = arith.addf %76, %85 : vector<9x2xf32>
    %cst_37 = arith.constant 4.000000e+00 : f32
    %87 = vector.broadcast %cst_37 : f32 to vector<9x2xf32>
    %88 = arith.addf %45, %87 : vector<9x2xf32>
    %89 = tpu.reciprocal %88 {approx = true} : vector<9x2xf32> -> vector<9x2xf32>
    %90 = arith.mulf %88, %89 : vector<9x2xf32>
    %cst_38 = arith.constant 2.000000e+00 : f32
    %91 = vector.broadcast %cst_38 : f32 to vector<9x2xf32>
    %92 = arith.subf %91, %90 : vector<9x2xf32>
    %93 = arith.mulf %89, %92 : vector<9x2xf32>
    %cst_39 = arith.constant 12.5073433 : f32
    %94 = vector.broadcast %cst_39 : f32 to vector<9x2xf32>
    %95 = arith.mulf %94, %93 : vector<9x2xf32>
    %96 = arith.addf %86, %95 : vector<9x2xf32>
    %cst_40 = arith.constant 5.000000e+00 : f32
    %97 = vector.broadcast %cst_40 : f32 to vector<9x2xf32>
    %98 = arith.addf %45, %97 : vector<9x2xf32>
    %99 = tpu.reciprocal %98 {approx = true} : vector<9x2xf32> -> vector<9x2xf32>
    %100 = arith.mulf %98, %99 : vector<9x2xf32>
    %cst_41 = arith.constant 2.000000e+00 : f32
    %101 = vector.broadcast %cst_41 : f32 to vector<9x2xf32>
    %102 = arith.subf %101, %100 : vector<9x2xf32>
    %103 = arith.mulf %99, %102 : vector<9x2xf32>
    %cst_42 = arith.constant -0.138571098 : f32
    %104 = vector.broadcast %cst_42 : f32 to vector<9x2xf32>
    %105 = arith.mulf %104, %103 : vector<9x2xf32>
    %106 = arith.addf %96, %105 : vector<9x2xf32>
    %cst_43 = arith.constant 6.000000e+00 : f32
    %107 = vector.broadcast %cst_43 : f32 to vector<9x2xf32>
    %108 = arith.addf %45, %107 : vector<9x2xf32>
    %109 = tpu.reciprocal %108 {approx = true} : vector<9x2xf32> -> vector<9x2xf32>
    %110 = arith.mulf %108, %109 : vector<9x2xf32>
    %cst_44 = arith.constant 2.000000e+00 : f32
    %111 = vector.broadcast %cst_44 : f32 to vector<9x2xf32>
    %112 = arith.subf %111, %110 : vector<9x2xf32>
    %113 = arith.mulf %109, %112 : vector<9x2xf32>
    %cst_45 = arith.constant 9.98436917E-6 : f32
    %114 = vector.broadcast %cst_45 : f32 to vector<9x2xf32>
    %115 = arith.mulf %114, %113 : vector<9x2xf32>
    %116 = arith.addf %106, %115 : vector<9x2xf32>
    %cst_46 = arith.constant 7.000000e+00 : f32
    %117 = vector.broadcast %cst_46 : f32 to vector<9x2xf32>
    %118 = arith.addf %45, %117 : vector<9x2xf32>
    %119 = tpu.reciprocal %118 {approx = true} : vector<9x2xf32> -> vector<9x2xf32>
    %120 = arith.mulf %118, %119 : vector<9x2xf32>
    %cst_47 = arith.constant 2.000000e+00 : f32
    %121 = vector.broadcast %cst_47 : f32 to vector<9x2xf32>
    %122 = arith.subf %121, %120 : vector<9x2xf32>
    %123 = arith.mulf %119, %122 : vector<9x2xf32>
    %cst_48 = arith.constant 1.50563267E-7 : f32
    %124 = vector.broadcast %cst_48 : f32 to vector<9x2xf32>
    %125 = arith.mulf %124, %123 : vector<9x2xf32>
    %126 = arith.addf %116, %125 : vector<9x2xf32>
    %cst_49 = arith.constant 6.500000e+00 : f32
    %127 = vector.broadcast %cst_49 : f32 to vector<9x2xf32>
    %128 = arith.addf %45, %127 : vector<9x2xf32>
    %cst_50 = arith.constant 5.000000e-01 : f32
    %129 = vector.broadcast %cst_50 : f32 to vector<9x2xf32>
    %130 = arith.subf %45, %129 : vector<9x2xf32>
    %131 = math.log %128 : vector<9x2xf32>
    %132 = arith.mulf %130, %131 : vector<9x2xf32>
    %cst_51 = arith.constant 0.918938517 : f32
    %133 = vector.broadcast %cst_51 : f32 to vector<9x2xf32>
    %134 = arith.addf %133, %132 : vector<9x2xf32>
    %135 = arith.subf %134, %128 : vector<9x2xf32>
    %136 = math.log %126 : vector<9x2xf32>
    %137 = arith.addf %135, %136 : vector<9x2xf32>
    %cst_52 = arith.constant 1.000000e+00 : f32
    %138 = vector.broadcast %cst_52 : f32 to vector<6x2xf32>
    %139 = arith.subf %33, %138 : vector<6x2xf32>
    %140 = math.log %41 : vector<6x2xf32>
    %141 = arith.mulf %139, %140 : vector<6x2xf32>
    %142 = vector.extract_strided_slice %137 {offsets = [0, 0], sizes = [6, 2], strides = [1, 1]} : vector<9x2xf32> to vector<6x2xf32>
    %143 = arith.subf %141, %142 : vector<6x2xf32>
    %cst_53 = arith.constant dense<0.000000e+00> : vector<2xf32>
    %144 = vector.multi_reduction <add>, %143, %cst_53 [0] : vector<6x2xf32> to vector<2xf32>
    %145 = vector.shape_cast %144 : vector<2xf32> to vector<1x2xf32>
    %146 = vector.extract_strided_slice %137 {offsets = [6, 0], sizes = [3, 2], strides = [1, 1]} : vector<9x2xf32> to vector<3x2xf32>
    %cst_54 = arith.constant dense<0.000000e+00> : vector<2xf32>
    %147 = vector.multi_reduction <add>, %146, %cst_54 [0] : vector<3x2xf32> to vector<2xf32>
    %148 = vector.shape_cast %147 : vector<2xf32> to vector<1x2xf32>
    %149 = arith.addf %145, %148 : vector<1x2xf32>
    %c0_55 = arith.constant 0 : index
    %c0_56 = arith.constant 0 : index
    %150 = vector.load %arg3[%c0_55, %c0_56] : memref<7x2xf32, #tpu.memory_space<vmem>>, vector<6x2xf32>
    tpu.vector_store %arg3[%c0_55, %c0_56], %33 {strides = array<i32>} : memref<7x2xf32, #tpu.memory_space<vmem>>, vector<6x2xf32>,
    %c6_57 = arith.constant 6 : index
    %c0_58 = arith.constant 0 : index
    %151 = vector.load %arg3[%c6_57, %c0_58] : memref<7x2xf32, #tpu.memory_space<vmem>>, vector<1x2xf32>
    tpu.vector_store %arg3[%c6_57, %c0_58], %149 {strides = array<i32>} : memref<7x2xf32, #tpu.memory_space<vmem>>, vector<1x2xf32>,
    return
  }
}

</mosaic_0001>

<llo_original>
// kernel: mlp_beta_actor_forward.1
$region0: #{mlp_beta_actor_forward.1}
  #allocation0 [shape = 'u32[]', space=smem, size = 0x4, offset = 0x4, fixed_abs, tag = 'smem constant byte address 0x4 - core index']
  #allocation1 [shape = 'u32[144,128]{1,0:T(1,128)}', space=vmem, size = 0x12000, scoped, tag = 'internal scratch']
  %s0 = inlined_call_operand.vmem [shape: f32[8,8,98], index: 0, kind: input, shape index: {}]
  %s1 = inlined_call_operand.vmem [shape: f32[36,98], index: 1, kind: input, shape index: {}]
  %s2 = inlined_call_operand.vmem [shape: f32[3,2], index: 2, kind: input, shape index: {}]
  %s3 = inlined_call_operand.vmem [shape: f32[7,2], index: 3, kind: output, shape index: {}]
  %s4 = sld [smem:[#allocation0]]
  $region22: #{mlp_beta_actor_forward.1} parent=0
    _
  %s6 = ssub.s32 1, %s4
  %s7 = scalar_select 0, %s6, %s4
  // Predicated region
  $region2: #{mlp_beta_actor_forward.1} parent=0 // pred_check
    _
  $region3: #{mlp_beta_actor_forward.1} parent=0 // pred_check_branch
    %9 = sbr.rel (0) target = $region5
  $region4: #{mlp_beta_actor_forward.1} parent=0 // pred_region
    _
  $region5: #{mlp_beta_actor_forward.1} parent=0 // pred_fallthru
    _
  // Predicated region
  $region6: #{mlp_beta_actor_forward.1} parent=0 // pred_check
    _
  $region7: #{mlp_beta_actor_forward.1} parent=0 // pred_check_branch
    %11 = sbr.rel (0) target = $region9
  $region8: #{mlp_beta_actor_forward.1} parent=0 // pred_region
    _
  $region9: #{mlp_beta_actor_forward.1} parent=0 // pred_fallthru
    _
  // Predicated region
  $region10: #{mlp_beta_actor_forward.1} parent=0 // pred_check
    _
  $region11: #{mlp_beta_actor_forward.1} parent=0 // pred_check_branch
    %13 = sbr.rel (0) target = $region13
  $region12: #{mlp_beta_actor_forward.1} parent=0 // pred_region
    _
  $region13: #{mlp_beta_actor_forward.1} parent=0 // pred_fallthru
    _
  %v14 = vld [vmem:[%s0] sm:$0xff]
  %v15 = vld [vmem:[%s0 + $0x8] sm:$0xff]
  %v16 = vld [vmem:[%s0 + $0x10] sm:$0xff]
  %v17 = vld [vmem:[%s0 + $0x18] sm:$0xff]
  %v18 = vld [vmem:[%s0 + $0x20] sm:$0xff]
  %v19 = vld [vmem:[%s0 + $0x28] sm:$0xff]
  %s20 = scalar_lea.vmem %s0, 48
  %v21 = vld [vmem:[%s20] sm:$0xff]
  %v22 = vld [vmem:[%s20] sm:$0x3f]
  %s23 = scalar_lea.vmem %s0, 56
  %v24 = vld [vmem:[%s23] sm:$0x3]
  %v25 = vld [vmem:[%s1] sm:$0xff]
  %v26 = vld [vmem:[%s1 + $0x8] sm:$0xff]
  %v27 = vld [vmem:[%s1 + $0x10] sm:$0xff]
  %v28 = vld [vmem:[%s1 + $0x18] sm:$0xff]
  %v29 = vld [vmem:[%s1 + $0x20] sm:$0xf]
  %31 = vset.pattern.permute.xlu0 36
  %32 = vperm.xlu0 %31, %v21
  %v33 = vpop.permute.xlu0 %32
  %vm35 = vcmask 293888
  %v36 = vsel %vm35, %v21, 0
  %vm38 = vcmask 1043456
  %v40 = vsel %vm38, %v29, 0
  %42 = vmatprep.subr.mxu0 0.0
  %43 = vmatpush1.msra.mxu0 %v25
  %44 = vmatprep.subr.mxu0 0.0
  %45 = vmatpush1.msra.mxu0 %v26
  %46 = vmatprep.subr.mxu0 0.0
  %47 = vmatpush1.msra.mxu0 %v27
  %48 = vmatprep.subr.mxu0 0.0
  %49 = vmatpush1.msra.mxu0 %v28
  %50 = vmatprep.subr.mxu0 0.0
  %51 = vmatpush1.msra.mxu0 %v40
  %52 = vmatprep.subr.mxu0 0.0
  %53 = vmatpush1.msra.mxu0 0.0
  %54 = vmatprep.subr.mxu0 0.0
  %55 = vmatpush1.msra.mxu0 0.0
  %56 = vmatprep.subr.mxu0 0.0
  %57 = vmatpush1.msra.mxu0 0.0
  %58 = vmatprep.subr.mxu0 0.0
  %59 = vmatpush1.msra.mxu0 0.0
  %60 = vmatprep.subr.mxu0 0.0
  %61 = vmatpush1.msra.mxu0 0.0
  %62 = vmatprep.subr.mxu0 0.0
  %63 = vmatpush1.msra.mxu0 0.0
  %64 = vmatprep.subr.mxu0 0.0
  %65 = vmatpush1.msra.mxu0 0.0
  %66 = vmatprep.subr.mxu0 0.0
  %67 = vmatpush1.msra.mxu0 0.0
  %68 = vmatprep.subr.mxu0 0.0
  %69 = vmatpush1.msra.mxu0 0.0
  %70 = vmatprep.subr.mxu0 0.0
  %71 = vmatpush1.msra.mxu0 0.0
  %72 = vmatprep.subr.mxu0 0.0
  %73 = vmatpush1.msra.mxu0 0.0
  %74 = vmatprep.subr.mxu0 0.0
  %75 = vmatpush1.msra.mxu0 0.0
  %76 = vmatprep.subr.mxu0 0.0
  %77 = vmatpush1.msra.mxu0 0.0
  %78 = vmatprep.subr.mxu0 0.0
  %79 = vmatpush1.msra.mxu0 0.0
  %80 = vmatprep.subr.mxu0 0.0
  %81 = vmatpush1.msra.mxu0 0.0
  %82 = vmatprep.subr.mxu0 0.0
  %83 = vmatpush1.msra.mxu0 0.0
  %84 = vmatprep.subr.mxu0 0.0
  %85 = vmatpush1.msra.mxu0 0.0
  %86 = vmatprep.subr.mxu0 0.0
  %87 = vmatpush1.msra.mxu0 0.0
  %88 = vmatprep.subr.mxu0 0.0
  %89 = vmatpush1.msra.mxu0 0.0
  %90 = vmatprep.subr.mxu0 0.0
  %91 = vmatpush1.msra.mxu0 0.0
  %92 = vmatprep.subr.mxu0 0.0
  %93 = vmatpush1.msra.mxu0 0.0
  %94 = vmatprep.subr.mxu0 0.0
  %95 = vmatpush1.msra.mxu0 0.0
  %96 = vmatprep.subr.mxu0 0.0
  %97 = vmatpush1.msra.mxu0 0.0
  %98 = vmatprep.subr.mxu0 0.0
  %99 = vmatpush1.msra.mxu0 0.0
  %100 = vmatprep.subr.mxu0 0.0
  %101 = vmatpush1.msra.mxu0 0.0
  %102 = vmatprep.subr.mxu0 0.0
  %103 = vmatpush1.msra.mxu0 0.0
  %104 = vmatprep.subr.mxu0 0.0
  %105 = vmatpush1.msra.mxu0 0.0
  %106 = vmatprep.mubr.f32.mxu0 0.0
  %107 = vmatmul.mubr.f32.gmra.mrb[0].mxu0 %v36
  %v108 = vpop.f32.mrb[0].mxu0
  %v109 = vadd.f32 %v33, %v108
  %v110 = vpop.f32.mrb[0].mxu0
  %111 = vdwg.mxu0
  %v112 = vmax.f32 %v109, 0.0
  %v113 = vmul.f32 %v14, %v112
  %v114 = vmul.f32 %v15, %v112
  %v115 = vmul.f32 %v16, %v112
  %v116 = vmul.f32 %v17, %v112
  %v117 = vmul.f32 %v18, %v112
  %v118 = vmul.f32 %v19, %v112
  %vm119 = vcmask 801792
  %v120 = vsel %vm119, %v113, 0.0
  %v121 = vrot.slane %v120, 4
  %v122 = vadd.f32 %v120, %v121
  %v123 = vrot.slane %v122, 2
  %v124 = vadd.f32 %v122, %v123
  %v125 = vrot.slane %v124, 1
  %v126 = vadd.f32 %v124, %v125
  %v127 = vsel %vm119, %v114, 0.0
  %v128 = vrot.slane %v127, 4
  %v129 = vadd.f32 %v127, %v128
  %v130 = vrot.slane %v129, 2
  %v131 = vadd.f32 %v129, %v130
  %v132 = vrot.slane %v131, 1
  %v133 = vadd.f32 %v131, %v132
  %v134 = vsel %vm119, %v115, 0.0
  %v135 = vrot.slane %v134, 4
  %v136 = vadd.f32 %v134, %v135
  %v137 = vrot.slane %v136, 2
  %v138 = vadd.f32 %v136, %v137
  %v139 = vrot.slane %v138, 1
  %v140 = vadd.f32 %v138, %v139
  %v141 = vsel %vm119, %v116, 0.0
  %v142 = vrot.slane %v141, 4
  %v143 = vadd.f32 %v141, %v142
  %v144 = vrot.slane %v143, 2
  %v145 = vadd.f32 %v143, %v144
  %v146 = vrot.slane %v145, 1
  %v147 = vadd.f32 %v145, %v146
  %v148 = vsel %vm119, %v117, 0.0
  %v149 = vrot.slane %v148, 4
  %v150 = vadd.f32 %v148, %v149
  %v151 = vrot.slane %v150, 2
  %v152 = vadd.f32 %v150, %v151
  %v153 = vrot.slane %v152, 1
  %v154 = vadd.f32 %v152, %v153
  %v155 = vsel %vm119, %v118, 0.0
  %v156 = vrot.slane %v155, 4
  %v157 = vadd.f32 %v155, %v156
  %v158 = vrot.slane %v157, 2
  %v159 = vadd.f32 %v157, %v158
  %v160 = vrot.slane %v159, 1
  %v161 = vadd.f32 %v159, %v160
  %163 = vset.pattern.permute.xlu0 37
  %164 = vperm.xlu0 %163, %v22
  %v165 = vpop.permute.xlu0 %164
  %vm173 = vcmask 1041409
  %v174 = vsel %vm173, %v133, %v126
  %vm175 = vcmask 1042434
  %v176 = vsel %vm175, %v140, %v174
  %vm177 = vcmask 1043459
  %v178 = vsel %vm177, %v147, %v176
  %vm179 = vcmask 1044484
  %v180 = vsel %vm179, %v154, %v178
  %vm181 = vcmask 1045509
  %v182 = vsel %vm181, %v161, %v180
  %v183 = vsel %vm119, %v182, 0
  %v186 = vsel %vm119, %v24, 0
  %188 = vmatprep.subr.mxu0 0.0
  %189 = vmatpush1.xpose.msra.mxu0 %v186
  %190 = vmatprep.subr.mxu0 0.0
  %191 = vmatpush1.xpose.msra.mxu0 0.0
  %192 = vmatprep.subr.mxu0 0.0
  %193 = vmatpush1.xpose.msra.mxu0 0.0
  %194 = vmatprep.subr.mxu0 0.0
  %195 = vmatpush1.xpose.msra.mxu0 0.0
  %196 = vmatprep.subr.mxu0 0.0
  %197 = vmatpush1.xpose.msra.mxu0 0.0
  %198 = vmatprep.subr.mxu0 0.0
  %199 = vmatpush1.xpose.msra.mxu0 0.0
  %200 = vmatprep.subr.mxu0 0.0
  %201 = vmatpush1.xpose.msra.mxu0 0.0
  %202 = vmatprep.subr.mxu0 0.0
  %203 = vmatpush1.xpose.msra.mxu0 0.0
  %204 = vmatprep.subr.mxu0 0.0
  %205 = vmatpush1.xpose.msra.mxu0 0.0
  %206 = vmatprep.subr.mxu0 0.0
  %207 = vmatpush1.xpose.msra.mxu0 0.0
  %208 = vmatprep.subr.mxu0 0.0
  %209 = vmatpush1.xpose.msra.mxu0 0.0
  %210 = vmatprep.subr.mxu0 0.0
  %211 = vmatpush1.xpose.msra.mxu0 0.0
  %212 = vmatprep.subr.mxu0 0.0
  %213 = vmatpush1.xpose.msra.mxu0 0.0
  %214 = vmatprep.subr.mxu0 0.0
  %215 = vmatpush1.xpose.msra.mxu0 0.0
  %216 = vmatprep.subr.mxu0 0.0
  %217 = vmatpush1.xpose.msra.mxu0 0.0
  %218 = vmatprep.subr.mxu0 0.0
  %219 = vmatpush1.xpose.msra.mxu0 0.0
  %220 = vmatprep.subr.mxu0 0.0
  %221 = vmatpush1.xpose.msra.mxu0 0.0
  %222 = vmatprep.subr.mxu0 0.0
  %223 = vmatpush1.xpose.msra.mxu0 0.0
  %224 = vmatprep.subr.mxu0 0.0
  %225 = vmatpush1.xpose.msra.mxu0 0.0
  %226 = vmatprep.subr.mxu0 0.0
  %227 = vmatpush1.xpose.msra.mxu0 0.0
  %228 = vmatprep.subr.mxu0 0.0
  %229 = vmatpush1.xpose.msra.mxu0 0.0
  %230 = vmatprep.subr.mxu0 0.0
  %231 = vmatpush1.xpose.msra.mxu0 0.0
  %232 = vmatprep.subr.mxu0 0.0
  %233 = vmatpush1.xpose.msra.mxu0 0.0
  %234 = vmatprep.subr.mxu0 0.0
  %235 = vmatpush1.xpose.msra.mxu0 0.0
  %236 = vmatprep.subr.mxu0 0.0
  %237 = vmatpush1.xpose.msra.mxu0 0.0
  %238 = vmatprep.subr.mxu0 0.0
  %239 = vmatpush1.xpose.msra.mxu0 0.0
  %240 = vmatprep.subr.mxu0 0.0
  %241 = vmatpush1.xpose.msra.mxu0 0.0
  %242 = vmatprep.subr.mxu0 0.0
  %243 = vmatpush1.xpose.msra.mxu0 0.0
  %244 = vmatprep.subr.mxu0 0.0
  %245 = vmatpush1.xpose.msra.mxu0 0.0
  %246 = vmatprep.subr.mxu0 0.0
  %247 = vmatpush1.xpose.msra.mxu0 0.0
  %248 = vmatprep.subr.mxu0 0.0
  %249 = vmatpush1.xpose.msra.mxu0 0.0
  %250 = vmatprep.subr.mxu0 0.0
  %251 = vmatpush1.xpose.msra.mxu0 0.0
  %252 = vmatprep.mubr.f32.mxu0 0.0
  %253 = vmatmul.mubr.f32.gmra.mrb[0].mxu0 %v183
  %v254 = vpop.f32.mrb[0].mxu0
  %v255 = vadd.f32 %v165, %v254
  %v256 = vpop.f32.mrb[0].mxu0
  %257 = vdwg.mxu0
  %v258 = vmax.f32 %v255, 0.0
  %v259 = vand.u32 2147483647, %v255
  %v260 = vsub.f32 0.0, %v259
  %v261 = vmul.f32 %v260, 1.442695
  %v262 = vpow.pop %v261
  %v263 = vadd.f32 %v262, 1.0
  %v264 = vlog2.pop %v263
  %v265 = vmul.f32 %v264, 0.6931472
  %v266 = vadd.f32 %v258, %v265
  %v267 = vadd.f32 %v266, 1.0
  %v268 = vld [vmem:[%s2] sm:$0x7]
  %v269 = vadd.f32 %v268, 1.0
  %v270 = vmul.f32 %v269, 0.5
  %v271 = vsub.f32 1.0, %v270
  %v273 = vrot.slane %v271, 5
  %vm275 = vcmask 1042432
  %v276 = vsel %vm275, %v270, %v273
  %v278 = vrot.slane %v267, 3
  %v280 = vadd.f32 %v267, %v278
  %v282 = vrot.slane %v280, 2
  %vm284 = vcmask 1045504
  %v285 = vsel %vm284, %v267, %v282
  %v286 = vadd.f32 %v285, 0.0
  %v287 = vadd.f32 %v282, 0.0
  %v288 = vrcp.pop %v286
  %v289 = vrcp.pop %v287
  %v290 = vmul.f32 %v286, %v288
  %v291 = vmul.f32 %v287, %v289
  %v292 = vsub.f32 2.0, %v290
  %v293 = vsub.f32 2.0, %v291
  %v294 = vmul.f32 %v288, %v292
  %v295 = vmul.f32 %v289, %v293
  %v296 = vmul.f32 %v294, 676.5204
  %v297 = vmul.f32 %v295, 676.5204
  %v298 = vadd.f32 %v296, 1.0
  %v299 = vadd.f32 %v297, 1.0
  %v300 = vadd.f32 %v285, 1.0
  %v301 = vadd.f32 %v282, 1.0
  %v302 = vrcp.pop %v300
  %v303 = vrcp.pop %v301
  %v304 = vmul.f32 %v300, %v302
  %v305 = vmul.f32 %v301, %v303
  %v306 = vsub.f32 2.0, %v304
  %v307 = vsub.f32 2.0, %v305
  %v308 = vmul.f32 %v302, %v306
  %v309 = vmul.f32 %v303, %v307
  %v310 = vmul.f32 %v308, -1259.1392
  %v311 = vmul.f32 %v309, -1259.1392
  %v312 = vadd.f32 %v298, %v310
  %v313 = vadd.f32 %v299, %v311
  %v314 = vadd.f32 %v285, 2.0
  %v315 = vadd.f32 %v282, 2.0
  %v316 = vrcp.pop %v314
  %v317 = vrcp.pop %v315
  %v318 = vmul.f32 %v314, %v316
  %v319 = vmul.f32 %v315, %v317
  %v320 = vsub.f32 2.0, %v318
  %v321 = vsub.f32 2.0, %v319
  %v322 = vmul.f32 %v316, %v320
  %v323 = vmul.f32 %v317, %v321
  %v324 = vmul.f32 %v322, 771.3234
  %v325 = vmul.f32 %v323, 771.3234
  %v326 = vadd.f32 %v312, %v324
  %v327 = vadd.f32 %v313, %v325
  %v328 = vadd.f32 %v285, 3.0
  %v329 = vadd.f32 %v282, 3.0
  %v330 = vrcp.pop %v328
  %v331 = vrcp.pop %v329
  %v332 = vmul.f32 %v328, %v330
  %v333 = vmul.f32 %v329, %v331
  %v334 = vsub.f32 2.0, %v332
  %v335 = vsub.f32 2.0, %v333
  %v336 = vmul.f32 %v330, %v334
  %v337 = vmul.f32 %v331, %v335
  %v338 = vmul.f32 %v336, -176.61504
  %v339 = vmul.f32 %v337, -176.61504
  %v340 = vadd.f32 %v326, %v338
  %v341 = vadd.f32 %v327, %v339
  %v342 = vadd.f32 %v285, 4.0
  %v343 = vadd.f32 %v282, 4.0
  %v344 = vrcp.pop %v342
  %v345 = vrcp.pop %v343
  %v346 = vmul.f32 %v342, %v344
  %v347 = vmul.f32 %v343, %v345
  %v348 = vsub.f32 2.0, %v346
  %v349 = vsub.f32 2.0, %v347
  %v350 = vmul.f32 %v344, %v348
  %v351 = vmul.f32 %v345, %v349
  %v352 = vmul.f32 %v350, 12.507343
  %v353 = vmul.f32 %v351, 12.507343
  %v354 = vadd.f32 %v340, %v352
  %v355 = vadd.f32 %v341, %v353
  %v356 = vadd.f32 %v285, 5.0
  %v357 = vadd.f32 %v282, 5.0
  %v358 = vrcp.pop %v356
  %v359 = vrcp.pop %v357
  %v360 = vmul.f32 %v356, %v358
  %v361 = vmul.f32 %v357, %v359
  %v362 = vsub.f32 2.0, %v360
  %v363 = vsub.f32 2.0, %v361
  %v364 = vmul.f32 %v358, %v362
  %v365 = vmul.f32 %v359, %v363
  %v366 = vmul.f32 %v364, -0.1385711
  %v367 = vmul.f32 %v365, -0.1385711
  %v368 = vadd.f32 %v354, %v366
  %v369 = vadd.f32 %v355, %v367
  %v370 = vadd.f32 %v285, 6.0
  %v371 = vadd.f32 %v282, 6.0
  %v372 = vrcp.pop %v370
  %v373 = vrcp.pop %v371
  %v374 = vmul.f32 %v370, %v372
  %v375 = vmul.f32 %v371, %v373
  %v376 = vsub.f32 2.0, %v374
  %v377 = vsub.f32 2.0, %v375
  %v378 = vmul.f32 %v372, %v376
  %v379 = vmul.f32 %v373, %v377
  %v380 = vmul.f32 %v378, 9.984369e-06
  %v381 = vmul.f32 %v379, 9.984369e-06
  %v382 = vadd.f32 %v368, %v380
  %v383 = vadd.f32 %v369, %v381
  %v384 = vadd.f32 %v285, 7.0
  %v385 = vadd.f32 %v282, 7.0
  %v386 = vrcp.pop %v384
  %v387 = vrcp.pop %v385
  %v388 = vmul.f32 %v384, %v386
  %v389 = vmul.f32 %v385, %v387
  %v390 = vsub.f32 2.0, %v388
  %v391 = vsub.f32 2.0, %v389
  %v392 = vmul.f32 %v386, %v390
  %v393 = vmul.f32 %v387, %v391
  %v394 = vmul.f32 %v392, 1.5056327e-07
  %v395 = vmul.f32 %v393, 1.5056327e-07
  %v396 = vadd.f32 %v382, %v394
  %v397 = vadd.f32 %v383, %v395
  %v398 = vadd.f32 %v285, 6.5
  %v399 = vadd.f32 %v282, 6.5
  %v400 = vsub.f32 %v285, 0.5
  %v401 = vsub.f32 %v282, 0.5
  %v402 = vlog2.pop %v398
  %v403 = vmul.f32 %v402, 0.6931472
  %v404 = vlog2.pop %v399
  %v405 = vmul.f32 %v404, 0.6931472
  %v406 = vmul.f32 %v400, %v403
  %v407 = vmul.f32 %v401, %v405
  %v408 = vadd.f32 %v406, 0.9189385
  %v409 = vadd.f32 %v407, 0.9189385
  %v410 = vsub.f32 %v408, %v398
  %v411 = vsub.f32 %v409, %v399
  %v412 = vlog2.pop %v396
  %v413 = vmul.f32 %v412, 0.6931472
  %v414 = vlog2.pop %v397
  %v415 = vmul.f32 %v414, 0.6931472
  %v416 = vadd.f32 %v410, %v413
  %v417 = vadd.f32 %v411, %v415
  %v418 = vsub.f32 %v267, 1.0
  %v419 = vlog2.pop %v276
  %v420 = vmul.f32 %v419, 0.6931472
  %v421 = vmul.f32 %v418, %v420
  %v422 = vsub.f32 %v421, %v416
  %vm423 = vcmask 13312
  %v424 = vsel %vm423, %v422, 0.0
  %v425 = vrot.slane %v424, 4
  %v426 = vadd.f32 %v424, %v425
  %v427 = vrot.slane %v426, 2
  %v428 = vadd.f32 %v426, %v427
  %v429 = vrot.slane %v428, 1
  %v430 = vadd.f32 %v428, %v429
  %vm433 = vcmask 1041408
  %v434 = vrot.slane %v416, 6
  %v435 = vrot.slane %v417, 6
  %v436 = vsel %vm433, %v434, %v435
  %vm438 = vcmask 10240
  %v439 = vsel %vm438, %v436, 0.0
  %v440 = vrot.slane %v439, 4
  %v441 = vadd.f32 %v439, %v440
  %v442 = vrot.slane %v441, 2
  %v443 = vadd.f32 %v441, %v442
  %v444 = vrot.slane %v443, 1
  %v445 = vadd.f32 %v443, %v444
  %v446 = vadd.f32 %v430, %v445
  %447 = vst.msk [vmem:[%s3] sm:$0x3f] %vm423, %v267
  %vm448 = vcmask 8192
  %449 = vst.msk [vmem:[%s3 + $0x6] sm:$0x1] %vm448, %v446
  // Predicated region
  $region14: #{mlp_beta_actor_forward.1} parent=0 // pred_check
    _
  $region15: #{mlp_beta_actor_forward.1} parent=0 // pred_check_branch
    %451 = sbr.rel (0) target = $region17
  $region16: #{mlp_beta_actor_forward.1} parent=0 // pred_region
    _
  $region17: #{mlp_beta_actor_forward.1} parent=0 // pred_fallthru
    _
  // Predicated region
  $region18: #{mlp_beta_actor_forward.1} parent=0 // pred_check
    _
  $region19: #{mlp_beta_actor_forward.1} parent=0 // pred_check_branch
    %453 = sbr.rel (0) target = $region21
  $region20: #{mlp_beta_actor_forward.1} parent=0 // pred_region
    _
  $region21: #{mlp_beta_actor_forward.1} parent=0 // pred_fallthru
    _

</llo_original>
